<compile_context>
chip_gen: v6e
topology: v6e:2x2x1
jax: 0.10.0
libtpu: 0.0.40
codegen_flags: <defaults>
</compile_context>

<pallas_src>
import math

import jax
import jax.numpy as jnp
from jax.experimental import pallas as pl
from jax.experimental.pallas import tpu as pltpu


def _round_up(n, m):
    return ((n + m - 1) // m) * m


def _make_kernel(dim):
    half_dim = dim // 2
    emb_scale = math.log(10000.0) / (half_dim - 1)

    def _sinusoidal_kernel(x_ref, out_ref):
        # x_ref:   [TB, 1]    (VMEM)
        # out_ref: [TB, dim]  (VMEM)
        # Frequencies computed in-kernel: iota -> scale (VPU) -> exp (EUP).
        idx = jax.lax.broadcasted_iota(jnp.int32, (1, half_dim), 1)
        freqs = jnp.exp(idx.astype(jnp.float32) * (-emb_scale))   # [1, half_dim]
        arg = x_ref[...] * freqs                                   # [TB, half_dim]
        # Two direct half-writes instead of concatenate (no relayout pass).
        out_ref[:, :half_dim] = jnp.sin(arg)
        out_ref[:, half_dim:] = jnp.cos(arg)

    return _sinusoidal_kernel


def sinusoidal_pos_emb(x, dim, *, tile_b=1024):
    """x: [B] float timesteps -> [B, dim] sinusoidal embedding (sin | cos)."""
    assert dim % 2 == 0, "dim must be even"
    assert dim >= 4, "dim must be >= 4 (half_dim - 1 must be nonzero)"
    assert tile_b % 8 == 0

    B = x.shape[0]
    x2d = x.astype(jnp.float32).reshape(B, 1)

    # Tile the batch dimension; pad B up to a multiple of the tile size.
    # For small B this clamps the tile so no padding (and no post-slice) occurs.
    tb = min(tile_b, _round_up(B, 8))
    B_pad = _round_up(B, tb)
    if B_pad != B:
        x2d = jnp.pad(x2d, ((0, B_pad - B), (0, 0)))

    out = pl.pallas_call(
        _make_kernel(dim),
        out_shape=jax.ShapeDtypeStruct((B_pad, dim), jnp.float32),
        grid=(B_pad // tb,),
        in_specs=[pl.BlockSpec((tb, 1), lambda i: (i, 0))],
        out_specs=pl.BlockSpec((tb, dim), lambda i: (i, 0)),
        compiler_params=pltpu.CompilerParams(
            dimension_semantics=("parallel",)),
    )(x2d)

    return out[:B] if B_pad != B else out


def _reference(x, dim):
    half_dim = dim // 2
    emb = math.log(10000.0) / (half_dim - 1)
    emb = jnp.exp(jnp.arange(half_dim, dtype=jnp.float32) * -emb)
    emb = x[:, None].astype(jnp.float32) * emb[None, :]
    return jnp.concatenate([jnp.sin(emb), jnp.cos(emb)], axis=-1)


if __name__ == "__main__":
    key = jax.random.PRNGKey(0)
    B, dim = 8, 32
    # Timesteps: typical DDPM usage feeds integer-valued timesteps as floats.
    x = jax.random.uniform(key, (B,), dtype=jnp.float32, minval=0.0, maxval=1000.0)

    out = sinusoidal_pos_emb(x, dim)
    out = jax.block_until_ready(out)

    ref = _reference(x, dim)
    assert out.shape == (B, dim)
    # Looser tolerance: freqs are generated in-kernel (EUP exp); a few-ULP
    # difference in a frequency is amplified by sin/cos of args up to ~1000 rad.
    assert jnp.allclose(out, ref, atol=2e-3, rtol=1e-3), (
        float(jnp.max(jnp.abs(out - ref))))

    print("KERNEL_OK")
</pallas_src>

<mosaic_0001>
module attributes {stable_mosaic.version = 11 : i64} {
  func.func @_sinusoidal_kernel(%arg0: i32, %arg1: memref<8x1xf32, #tpu.memory_space<vmem>>, %arg2: memref<8x32xf32, #tpu.memory_space<vmem>>) attributes {dimension_semantics = [#tpu.dimension_semantics<parallel>], iteration_bounds = array<i64: 1>, scalar_prefetch = 0 : i64, scratch_operands = 0 : i64, tpu.core_type = #tpu.core_type<tc>, window_params = [{transform_indices = @transform_0, window_bounds = array<i64: 8, 1>}, {transform_indices = @transform_1, window_bounds = array<i64: 8, 32>}]} {
    %0 = tpu.iota {dimensions = array<i32: 1>} : vector<1x16xi32>
    %1 = arith.sitofp %0 : vector<1x16xi32> to vector<1x16xf32>
    %cst = arith.constant -0.614022672 : f32
    %2 = vector.broadcast %cst : f32 to vector<1x16xf32>
    %3 = arith.mulf %1, %2 : vector<1x16xf32>
    %4 = math.exp %3 : vector<1x16xf32>
    %c0 = arith.constant 0 : index
    %c0_0 = arith.constant 0 : index
    %5 = vector.load %arg1[%c0, %c0_0] : memref<8x1xf32, #tpu.memory_space<vmem>>, vector<8x1xf32>
    %6 = vector.broadcast %5 : vector<8x1xf32> to vector<8x16xf32>
    %7 = vector.broadcast %4 : vector<1x16xf32> to vector<8x16xf32>
    %8 = arith.mulf %6, %7 : vector<8x16xf32>
    %9 = math.sin %8 : vector<8x16xf32>
    %c0_1 = arith.constant 0 : index
    %c0_2 = arith.constant 0 : index
    %10 = vector.load %arg2[%c0_1, %c0_2] : memref<8x32xf32, #tpu.memory_space<vmem>>, vector<8x16xf32>
    tpu.vector_store %arg2[%c0_1, %c0_2], %9 {strides = array<i32>} : memref<8x32xf32, #tpu.memory_space<vmem>>, vector<8x16xf32>,
    %11 = math.cos %8 : vector<8x16xf32>
    %c0_3 = arith.constant 0 : index
    %c16 = arith.constant 16 : index
    %12 = vector.load %arg2[%c0_3, %c16] : memref<8x32xf32, #tpu.memory_space<vmem>>, vector<8x16xf32>
    tpu.vector_store %arg2[%c0_3, %c16], %11 {strides = array<i32>} : memref<8x32xf32, #tpu.memory_space<vmem>>, vector<8x16xf32>,
    return
  }
  func.func @transform_0(%arg0: i32) -> (i32, i32) {
    %c0_i32 = arith.constant 0 : i32
    %c0_i32_0 = arith.constant 0 : i32
    return %arg0, %c0_i32 : i32, i32
  }
  func.func @transform_1(%arg0: i32) -> (i32, i32) {
    %c0_i32 = arith.constant 0 : i32
    %c0_i32_0 = arith.constant 0 : i32
    return %arg0, %c0_i32 : i32, i32
  }
}

</mosaic_0001>

<llo_original>
// kernel: tpu_custom_call.1
$region0: #{tpu_custom_call.1}
  #allocation0 [shape = 'u32[]', space=smem, size = 0x4, offset = 0x4, fixed_abs, tag = 'smem constant byte address 0x4 - core index']
  #allocation1 [shape = 'u32[144,128]{1,0:T(1,128)}', space=vmem, size = 0x12000, scoped, tag = 'internal scratch']
  %s0 = inlined_call_operand.vmem [shape: f32[8,1], index: 0, kind: input, shape index: {}]
  %s1 = inlined_call_operand.hbm [shape: f32[8,32], index: 1, kind: output, shape index: {}]
  %s2 = sld [smem:[#allocation0]]
  $region14: #{tpu_custom_call.1} parent=0
    _
  %s4 = ssub.s32 1, %s2
  %s5 = scalar_select 0, %s4, %s2
  $region1: #{tpu_custom_call.1} parent=0
    #allocation2 [shape = 'u8[4096]{0}', space=vmem, size = 0x1000, scoped, tag = 'output window, operand 0, single buffered']
    #allocation3 [shape = 's32[1]{0}', space=sflag, size = 0x4, scoped, tag = 'scoped memory for tpu_custom_call.1']
    %6 = vsyncpa [#allocation3], 0
    // Predicated region
    $region2: #{tpu_custom_call.1} parent=1 // pred_check
      _
    $region3: #{tpu_custom_call.1} parent=1 // pred_check_branch
      %8 = sbr.rel (0) target = $region5
    $region4: #{tpu_custom_call.1} parent=1 // pred_region
      _
    $region5: #{tpu_custom_call.1} parent=1 // pred_fallthru
      _
    %v9 = vlaneseq
    %v10 = vand.u32 %v9, 127
    %v11 = vcvt.s32.f32 %v10
    %v12 = vmul.f32 %v11, -0.6140227
    %v13 = vmul.f32 %v12, 1.442695
    %v14 = vpow.pop %v13
    %v15 = vld [vmem:[%s0] sm:$0xff]
    %17 = vset.pattern.permute.xlu0 0
    %18 = vperm.xlu0 %17, %v15
    %v19 = vpop.permute.xlu0 %18
    %v21 = vmul.f32 %v19, %v14
    %v22 = vand.u32 2147483647, %v21
    %vm23 = vcmp.le.f32.partialorder %v22, 0.7853982
    %vm24 = vcmp.lt.s32.totalorder %v21, 0
    %v25 = vand.u32 %v21, 2139095040
    %v26 = vshrl.u32 %v25, 23
    %v27 = vsub.s32 %v26, 127
    %v28 = vand.u32 2147483647, %v21
    %v29 = vand.u32 %v28, 8388607
    %v30 = vor.u32 %v29, 8388608
    %v31 = vsub.s32 0, %v30
    %v32 = vadd.s32 %v27, 1
    %vm33 = vcmp.gt.s32.totalorder %v32, 0
    %v34 = vsel %vm33, %v32, 0
    %v35 = vshrl.u32 %v34, 5
    %v36 = vand.u32 %v34, 31
    %v37 = vsub.s32 32, %v36
    %v38 = vshrl.u32 683565275, %v37
    %v39 = vshll.u32 683565275, %v36
    %v40 = vshrl.u32 2475754826, %v37
    %v41 = vor.u32 %v39, %v40
    %v42 = vshll.u32 2475754826, %v36
    %v43 = vshrl.u32 2131351028, %v37
    %v44 = vor.u32 %v42, %v43
    %v45 = vshll.u32 2131351028, %v36
    %v46 = vshrl.u32 2102212464, %v37
    %v47 = vor.u32 %v45, %v46
    %v48 = vshll.u32 2102212464, %v36
    %v49 = vshrl.u32 920167782, %v37
    %v50 = vor.u32 %v48, %v49
    %v51 = vshll.u32 920167782, %v36
    %v52 = vshrl.u32 1326507024, %v37
    %v53 = vor.u32 %v51, %v52
    %vm54 = vcmp.lt.s32.totalorder %v35, 1
    %vm55 = vcmp.lt.s32.totalorder %v35, 2
    %vm56 = vcmp.lt.s32.totalorder %v35, 3
    %vm57 = vcmp.lt.s32.totalorder %v35, 4
    %v58 = vsel %vm54, %v38, %v41
    %v59 = vsel %vm57, %v47, 2102212464
    %v60 = vsel %vm56, %v44, %v59
    %v61 = vsel %vm55, %v58, %v60
    %v62 = vsel %vm54, %v41, %v44
    %v63 = vsel %vm57, %v50, 920167782
    %v64 = vsel %vm56, %v47, %v63
    %v65 = vsel %vm55, %v62, %v64
    %v66 = vsel %vm54, %v44, %v47
    %v67 = vsel %vm57, %v53, 1326507024
    %v68 = vsel %vm56, %v50, %v67
    %v69 = vsel %vm55, %v66, %v68
    %v70 = vshll.u32 %v30, 8
    %v71 = vmul.u32.u64.compose %v70, %v69
    %v72 = vextract.low.u32 %v71
    %v73 = vextract.high.u32 %v71
    %v74 = vmul.u32.u64.compose %v70, %v65
    %v75 = vextract.low.u32 %v74
    %v76 = vextract.high.u32 %v74
    %v77 = vmul.u32 %v70, %v61
    %v78 = vadd.s32 %v73, %v75
    %vm79 = vc.u32 %v73, %v75
    %v80 = vadd.s32 %v76, 1
    %v81 = vsel %vm79, %v80, %v76
    %v82 = vadd.s32 %v77, %v81
    %v83 = vadd.s32 %v82, 536870912
    %v84 = vshrl.u32 %v83, 30
    %v85 = vshll.u32 %v84, 30
    %v86 = vsub.s32 %v82, %v85
    %vm87 = vcmp.lt.s32.totalorder %v86, 0
    %v88 = vsub.s32 0, %v86
    %v89 = vsel %vm87, %v88, %v86
    %v90 = vclz %v89
    %v91 = vsub.s32 %v90, 2
    %vm92 = vcmp.gt.s32.totalorder 0, %v91
    %v93 = vsel %vm92, 0, %v91
    %v94 = vsub.s32 32, %v93
    %v95 = vshll.u32 %v86, %v93
    %v96 = vshrl.u32 %v78, %v94
    %v97 = vor.u32 %v95, %v96
    %v98 = vsub.s32 4294967266, %v93
    %v99 = vadd.s32 %v98, 127
    %v100 = vshll.u32 %v99, 23
    %v101 = vor.u32 4788187, %v100
    %v102 = vand.u32 2147483647, %v101
    %v104 = vcvt.s32.f32 %v97
    %v105 = vmul.f32 %v104, %v102
    %v106 = vxor.u32 %v105, 2147483648
    %v107 = vsel %vm24, %v106, %v105
    %v108 = vsub.s32 4, %v84
    %v109 = vsel %vm24, %v108, %v84
    %v110 = vsel %vm23, %v21, %v107
    %v111 = vsel %vm23, 0, %v109
    %v112 = vcosq.f32.pop %v110
    %v113 = vsinq.f32.pop %v110
    %vm114 = vweird.f32 %v21
    %v115 = vadd.s32 %v111, 3
    %v116 = vand.u32 %v115, 3
    %vm117 = vcmp.lt.s32.totalorder %v116, 2
    %vm118 = vcmp.eq.s32.totalorder %v116, 0
    %v119 = vxor.u32 %v113, 2147483648
    %v120 = vsel %vm118, %v112, %v119
    %vm121 = vcmp.eq.s32.totalorder %v116, 2
    %v122 = vxor.u32 %v112, 2147483648
    %v123 = vsel %vm121, %v122, %v113
    %v124 = vsel %vm117, %v120, %v123
    %v125 = vsel %vm114, nan, %v124
    %vm126 = vcmask 130048
    %127 = vst.msk [vmem:[#allocation2] sm:$0xff] %vm126, %v125
    %v128 = vand.u32 2147483647, %v21
    %vm129 = vcmp.le.f32.partialorder %v128, 0.7853982
    %vm130 = vcmp.lt.s32.totalorder %v21, 0
    %v131 = vand.u32 %v21, 2139095040
    %v132 = vshrl.u32 %v131, 23
    %v133 = vsub.s32 %v132, 127
    %v134 = vand.u32 2147483647, %v21
    %v135 = vand.u32 %v134, 8388607
    %v136 = vor.u32 %v135, 8388608
    %v137 = vsub.s32 0, %v136
    %v138 = vadd.s32 %v133, 1
    %vm139 = vcmp.gt.s32.totalorder %v138, 0
    %v140 = vsel %vm139, %v138, 0
    %v141 = vshrl.u32 %v140, 5
    %v142 = vand.u32 %v140, 31
    %v143 = vsub.s32 32, %v142
    %v144 = vshrl.u32 683565275, %v143
    %v145 = vshll.u32 683565275, %v142
    %v146 = vshrl.u32 2475754826, %v143
    %v147 = vor.u32 %v145, %v146
    %v148 = vshll.u32 2475754826, %v142
    %v149 = vshrl.u32 2131351028, %v143
    %v150 = vor.u32 %v148, %v149
    %v151 = vshll.u32 2131351028, %v142
    %v152 = vshrl.u32 2102212464, %v143
    %v153 = vor.u32 %v151, %v152
    %v154 = vshll.u32 2102212464, %v142
    %v155 = vshrl.u32 920167782, %v143
    %v156 = vor.u32 %v154, %v155
    %v157 = vshll.u32 920167782, %v142
    %v158 = vshrl.u32 1326507024, %v143
    %v159 = vor.u32 %v157, %v158
    %vm160 = vcmp.lt.s32.totalorder %v141, 1
    %vm161 = vcmp.lt.s32.totalorder %v141, 2
    %vm162 = vcmp.lt.s32.totalorder %v141, 3
    %vm163 = vcmp.lt.s32.totalorder %v141, 4
    %v164 = vsel %vm160, %v144, %v147
    %v165 = vsel %vm163, %v153, 2102212464
    %v166 = vsel %vm162, %v150, %v165
    %v167 = vsel %vm161, %v164, %v166
    %v168 = vsel %vm160, %v147, %v150
    %v169 = vsel %vm163, %v156, 920167782
    %v170 = vsel %vm162, %v153, %v169
    %v171 = vsel %vm161, %v168, %v170
    %v172 = vsel %vm160, %v150, %v153
    %v173 = vsel %vm163, %v159, 1326507024
    %v174 = vsel %vm162, %v156, %v173
    %v175 = vsel %vm161, %v172, %v174
    %v176 = vshll.u32 %v136, 8
    %v177 = vmul.u32.u64.compose %v176, %v175
    %v178 = vextract.low.u32 %v177
    %v179 = vextract.high.u32 %v177
    %v180 = vmul.u32.u64.compose %v176, %v171
    %v181 = vextract.low.u32 %v180
    %v182 = vextract.high.u32 %v180
    %v183 = vmul.u32 %v176, %v167
    %v184 = vadd.s32 %v179, %v181
    %vm185 = vc.u32 %v179, %v181
    %v186 = vadd.s32 %v182, 1
    %v187 = vsel %vm185, %v186, %v182
    %v188 = vadd.s32 %v183, %v187
    %v189 = vadd.s32 %v188, 536870912
    %v190 = vshrl.u32 %v189, 30
    %v191 = vshll.u32 %v190, 30
    %v192 = vsub.s32 %v188, %v191
    %vm193 = vcmp.lt.s32.totalorder %v192, 0
    %v194 = vsub.s32 0, %v192
    %v195 = vsel %vm193, %v194, %v192
    %v196 = vclz %v195
    %v197 = vsub.s32 %v196, 2
    %vm198 = vcmp.gt.s32.totalorder 0, %v197
    %v199 = vsel %vm198, 0, %v197
    %v200 = vsub.s32 32, %v199
    %v201 = vshll.u32 %v192, %v199
    %v202 = vshrl.u32 %v184, %v200
    %v203 = vor.u32 %v201, %v202
    %v204 = vsub.s32 4294967266, %v199
    %v205 = vadd.s32 %v204, 127
    %v206 = vshll.u32 %v205, 23
    %v207 = vor.u32 4788187, %v206
    %v208 = vand.u32 2147483647, %v207
    %v210 = vcvt.s32.f32 %v203
    %v211 = vmul.f32 %v210, %v208
    %v212 = vxor.u32 %v211, 2147483648
    %v213 = vsel %vm130, %v212, %v211
    %v214 = vsub.s32 4, %v190
    %v215 = vsel %vm130, %v214, %v190
    %v216 = vsel %vm129, %v21, %v213
    %v217 = vsel %vm129, 0, %v215
    %v218 = vcosq.f32.pop %v216
    %v219 = vsinq.f32.pop %v216
    %vm220 = vweird.f32 %v21
    %v221 = vand.u32 %v217, 3
    %vm222 = vcmp.lt.s32.totalorder %v221, 2
    %vm223 = vcmp.eq.s32.totalorder %v221, 0
    %v224 = vxor.u32 %v219, 2147483648
    %v225 = vsel %vm223, %v218, %v224
    %vm226 = vcmp.eq.s32.totalorder %v221, 2
    %v227 = vxor.u32 %v218, 2147483648
    %v228 = vsel %vm226, %v227, %v219
    %v229 = vsel %vm222, %v225, %v228
    %v230 = vsel %vm220, nan, %v229
    %232 = vrot.lane.b32.xlu0 %v230, 16
    %v233 = vpop.permute.xlu0 %232
    %vm235 = vcmask 261248
    %236 = vst.msk [vmem:[#allocation2] sm:$0xff] %vm235, %v233
    // Predicated region
    $region6: #{tpu_custom_call.1} parent=1 // pred_check
      _
    $region7: #{tpu_custom_call.1} parent=1 // pred_check_branch
      %238 = sbr.rel (0) target = $region9
    $region8: #{tpu_custom_call.1} parent=1 // pred_region
      %s240 = ssub.s32 128, 128
      %241 = vsyncadd [#allocation3], %s240
      %s243 = sshll.u32 [#allocation2], 4
      %s244 = int_to_ptr.vmem [resolvable:$true] %s243
      %246 = dma.vmem_to_hbm [thread:$0]  %s244, 128, %s1, [#allocation3]
    $region9: #{tpu_custom_call.1} parent=1 // pred_fallthru
      _
    // Predicated region
    $region10: #{tpu_custom_call.1} parent=1 // pred_check
      _
    $region11: #{tpu_custom_call.1} parent=1 // pred_check_branch
      %248 = sbr.rel (0) target = $region13
    $region12: #{tpu_custom_call.1} parent=1 // pred_region
      %249 = dma.done [#allocation3], 128
    $region13: #{tpu_custom_call.1} parent=1 // pred_fallthru
      _
    %250 = vsyncpa [#allocation3], 1

</llo_original>
